<compile_context>
chip_gen: v7x
topology: tpu7x:2x2x1
jax: 0.10.0
libtpu: 0.0.40
codegen_flags: <defaults>
</compile_context>

<pallas_src>
import functools
import math

import jax
import jax.numpy as jnp
from jax.experimental import pallas as pl
from jax.experimental.pallas import tpu as pltpu


_SQRT_2_OVER_PI = math.sqrt(2.0 / math.pi)


def _gelu_tanh(x):
    # PyTorch nn.GELU(approximate='tanh'):
    #   0.5 * x * (1 + tanh(sqrt(2/pi) * (x + 0.044715 * x^3)))
    return 0.5 * x * (1.0 + jnp.tanh(_SQRT_2_OVER_PI * (x + 0.044715 * x * x * x)))


def _round_up(n, m):
    return ((n + m - 1) // m) * m


def _mlp_kernel(x_ref, w_fc_ref, b_fc_ref, w_proj_ref, b_proj_ref, o_ref,
                *scratch, n_h_blocks, compute_dtype, gelu_dtype):
    # x_ref:      (TM, D)  activation tile, already in compute_dtype
    # w_fc_ref:   (D, TH)  pre-transposed c_fc weight block
    # b_fc_ref:   (1, TH)  f32
    # w_proj_ref: (TH, D)  pre-transposed c_proj weight block
    # b_proj_ref: (1, D)   f32
    # o_ref:      (TM, D)
    # scratch:    () if n_h_blocks == 1 else (acc_ref (TM, D) f32,)
    hidden = jnp.dot(x_ref[...], w_fc_ref[...],
                     preferred_element_type=jnp.float32)       # MXU, f32 acc
    hidden = (hidden + b_fc_ref[...]).astype(gelu_dtype)        # f32 bias add
    hidden = _gelu_tanh(hidden).astype(compute_dtype)           # VPU/EUP
    contrib = jnp.dot(hidden, w_proj_ref[...],
                      preferred_element_type=jnp.float32)       # MXU, f32 acc

    if n_h_blocks == 1:
        # Full hidden dim in one step: write straight out, no accumulator.
        o_ref[...] = (contrib + b_proj_ref[...]).astype(o_ref.dtype)
    else:
        acc_ref, = scratch
        h = pl.program_id(1)

        @pl.when(h == 0)
        def _():
            acc_ref[...] = contrib

        @pl.when(h > 0)
        def _():
            acc_ref[...] += contrib

        @pl.when(h == n_h_blocks - 1)
        def _():
            o_ref[...] = (acc_ref[...] + b_proj_ref[...]).astype(o_ref.dtype)


def _vmem_budget_bytes():
    """Per-generation VMEM cap with headroom for Mosaic internal scratch."""
    cap = 64 * 1024 * 1024                      # conservative default (v7x/TC)
    try:
        info = pltpu.get_tpu_info()
        for name in ("vmem_capacity_bytes", "vmem_size_bytes"):
            v = getattr(info, name, None)
            if v:
                cap = int(v)
                break
    except Exception:
        pass
    return int(cap * 0.85)                      # ~108 MiB v5e/v6e, ~54 MiB v7x


def _pick_tm(M, block_m):
    """Token tile: multiple of 8, <= block_m. Prefer exact divisors of M
    (avoids the jnp.pad HBM copy) and >=2 tiles when there is enough work so
    v7x's second TensorCore gets a share (dimension_semantics 'parallel')."""
    m8 = _round_up(M, 8)
    if m8 <= block_m:
        if m8 > 256:                            # enough work for 2 TCs
            return _round_up((M + 1) // 2, 8)
        return m8
    hi = block_m - block_m % 8
    for cand in range(hi, 127, -8):             # exact divisor -> no padding
        if M % cand == 0:
            return cand
    return hi                                   # rare fallback: padded tail


def _pick_th(H, D, tm, itm_c, itm_out, budget, block_h):
    """Hidden tile: full H if it fits the VMEM budget, else the largest
    multiple of 128 dividing H that does (weights stream over the H axis)."""
    if block_h is not None:
        assert block_h == H or (block_h % 128 == 0 and H % block_h == 0), \
            "block_h must equal H or be a multiple of 128 dividing H"
        return min(block_h, H)
    cands = [H]
    if H % 128 == 0:
        n = H // 128
        divs = sorted({d for d in range(1, n + 1) if n % d == 0}, reverse=True)
        cands += [128 * d for d in divs if 128 * d < H]
    for th in cands:
        nbuf = 1 if th == H else 2              # resident vs pipelined weights
        need = (2 * D * th * itm_c * nbuf       # W_fc^T / W_proj^T blocks
                + th * 4 * nbuf + D * 4         # biases
                + 2 * tm * D * itm_c            # x tile (double buffered)
                + 2 * tm * D * itm_out          # out tile
                + tm * D * 4                    # f32 accumulator
                + tm * th * (4 + itm_c))        # hidden intermediate headroom
        if need <= budget:
            return th
    return cands[-1]


def mlp_forward(x, w_fc, b_fc, w_proj, b_proj, *, compute_dtype=None,
                block_m=512, block_h=None, gelu_dtype=None):
    """nanoGPT MLP forward. x: (B, T, D). PyTorch nn.Linear layouts:
       w_fc: (4D, D), b_fc: (4D,), w_proj: (D, 4D), b_proj: (D,).

    compute_dtype: dtype fed to the MXU (e.g. jnp.bfloat16); accumulation is
    always f32. gelu_dtype: dtype for bias+GELU (default f32; bf16 is a
    VPU/EUP win on v6e/v7x). block_m/block_h: tile-size caps."""
    B, T, D = x.shape
    H = w_fc.shape[0]
    assert w_fc.shape == (H, D) and w_proj.shape == (D, H)
    assert b_fc.shape == (H,) and b_proj.shape == (D,)
    M = B * T

    cdt = jnp.dtype(compute_dtype) if compute_dtype is not None else jnp.dtype(x.dtype)
    out_dtype = x.dtype
    gelu_dt = jnp.dtype(gelu_dtype) if gelu_dtype is not None else jnp.dtype(jnp.float32)

    # Producer-side casts / one-time weight transposes (constant-folded under
    # jit when params are static): both in-kernel dots then use the standard
    # (last, first) contraction -> no per-grid-step weight transposes.
    x2 = x.reshape(M, D).astype(cdt)
    w_fc_t = w_fc.T.astype(cdt)                  # (D, H)
    w_proj_t = w_proj.T.astype(cdt)              # (H, D)
    b_fc_2d = b_fc.reshape(1, H).astype(jnp.float32)
    b_proj_2d = b_proj.reshape(1, D).astype(jnp.float32)

    itm_c = jnp.dtype(cdt).itemsize
    itm_out = jnp.dtype(out_dtype).itemsize

    budget = _vmem_budget_bytes()
    tm = _pick_tm(M, block_m)
    m_pad = _round_up(M, tm)
    if m_pad != M:                               # rare fallback: zero-pad tail
        x2 = jnp.pad(x2, ((0, m_pad - M), (0, 0)))
    grid_m = m_pad // tm

    th = _pick_th(H, D, tm, itm_c, itm_out, budget, block_h)
    grid_h = pl.cdiv(H, th)
    assert H % th == 0

    weight_bytes = 2 * D * H * itm_c + (H + D) * 4
    cost = pl.CostEstimate(
        flops=4 * M * D * H,                     # two matmuls
        transcendentals=M * H,                   # one tanh per hidden element
        bytes_accessed=int(M * D * (itm_c + itm_out)
                           + weight_bytes * (grid_m if grid_h > 1 else 1)))

    nbuf_w = 1 if grid_h == 1 else 2
    need = (2 * D * th * itm_c * nbuf_w + th * 4 * nbuf_w + D * 4
            + 2 * tm * D * itm_c + 2 * tm * D * itm_out
            + (tm * D * 4 if grid_h > 1 else 0)
            + tm * th * (4 + itm_c))
    vmem_limit = int(min(max(int(1.5 * need), 32 * 1024 * 1024), budget))

    def _spec(shape, imap, single_buffer):
        # Buffered(1): operands whose block index never changes need only one
        # buffer (default double-buffering would waste VMEM on them).
        if single_buffer:
            return pl.BlockSpec(shape, imap, pipeline_mode=pl.Buffered(1))
        return pl.BlockSpec(shape, imap)

    in_specs = [
        _spec((tm, D), lambda i, h: (i, 0), grid_m == 1),   # x tile
        _spec((D, th), lambda i, h: (0, h), grid_h == 1),   # W_fc^T block
        _spec((1, th), lambda i, h: (0, h), grid_h == 1),   # b_fc block
        _spec((th, D), lambda i, h: (h, 0), grid_h == 1),   # W_proj^T block
        _spec((1, D), lambda i, h: (0, 0), True),           # b_proj (resident)
    ]
    out_spec = pl.BlockSpec((tm, D), lambda i, h: (i, 0))
    scratch = [] if grid_h == 1 else [pltpu.VMEM((tm, D), jnp.float32)]

    kernel = functools.partial(_mlp_kernel, n_h_blocks=grid_h,
                               compute_dtype=cdt, gelu_dtype=gelu_dt)

    out = pl.pallas_call(
        kernel,
        out_shape=jax.ShapeDtypeStruct((m_pad, D), out_dtype),
        grid_spec=pltpu.PrefetchScalarGridSpec(
            num_scalar_prefetch=0,
            grid=(grid_m, grid_h),
            in_specs=in_specs,
            out_specs=out_spec,
            scratch_shapes=scratch),
        compiler_params=pltpu.CompilerParams(
            dimension_semantics=("parallel", "arbitrary"),
            vmem_limit_bytes=vmem_limit),
        cost_estimate=cost,
    )(x2, w_fc_t, b_fc_2d, w_proj_t, b_proj_2d)

    if m_pad != M:
        out = out[:M]
    return out.reshape(B, T, D)


def _reference(x, w_fc, b_fc, w_proj, b_proj):
    h = x @ w_fc.T + b_fc
    h = 0.5 * h * (1.0 + jnp.tanh(_SQRT_2_OVER_PI * (h + 0.044715 * h ** 3)))
    return h @ w_proj.T + b_proj


if __name__ == "__main__":
    key = jax.random.PRNGKey(0)

    def make_params(k, D, H):
        k1, k2, k3, k4 = jax.random.split(k, 4)
        bf, bp = 1.0 / math.sqrt(D), 1.0 / math.sqrt(H)
        return (jax.random.uniform(k1, (H, D), jnp.float32, -bf, bf),
                jax.random.uniform(k2, (H,), jnp.float32, -bf, bf),
                jax.random.uniform(k3, (D, H), jnp.float32, -bp, bp),
                jax.random.uniform(k4, (D,), jnp.float32, -bp, bp))

    kp, kx1, kx2, kx3, kp2, kx4 = jax.random.split(key, 6)

    # Config consistent with the module: n_embd=32 -> hidden = 4*32 = 128.
    D, H = 32, 128
    w_fc, b_fc, w_proj, b_proj = make_params(kp, D, H)

    # 1) f32 path, single token tile (B=2, T=8 -> M=16).
    x = jax.random.normal(kx1, (2, 8, D), dtype=jnp.float32)
    y = mlp_forward(x, w_fc, b_fc, w_proj, b_proj)
    jax.block_until_ready(y)
    y_ref = _reference(x, w_fc, b_fc, w_proj, b_proj)
    assert y.shape == x.shape
    assert jnp.allclose(y, y_ref, atol=1e-4, rtol=1e-4), "f32 single-tile mismatch"

    # 2) Multi-tile path without padding (M=400 -> tm=200, grid_m=2).
    xb = jax.random.normal(kx2, (2, 200, D), dtype=jnp.float32)
    yb = mlp_forward(xb, w_fc, b_fc, w_proj, b_proj)
    jax.block_until_ready(yb)
    assert jnp.allclose(yb, _reference(xb, w_fc, b_fc, w_proj, b_proj),
                        atol=1e-4, rtol=1e-4), "multi-tile mismatch"

    # 3) Ragged-tail fallback (M=13 -> padded to 16, pad sliced off).
    xr = jax.random.normal(kx3, (1, 13, D), dtype=jnp.float32)
    yr = mlp_forward(xr, w_fc, b_fc, w_proj, b_proj)
    jax.block_until_ready(yr)
    assert jnp.allclose(yr, _reference(xr, w_fc, b_fc, w_proj, b_proj),
                        atol=1e-4, rtol=1e-4), "ragged-tail mismatch"

    # 4) bf16 MXU operands (f32 accumulation / bias / GELU), looser tolerance.
    yh = mlp_forward(x, w_fc, b_fc, w_proj, b_proj, compute_dtype=jnp.bfloat16)
    jax.block_until_ready(yh)
    assert jnp.allclose(yh, y_ref, atol=5e-2, rtol=5e-2), "bf16 mismatch"

    # 5) Hidden-dim tiling path (D=64, H=256, TH=128 -> grid_h=2), exercising
    #    the pl.when init / accumulate / finalize accumulator.
    D2, H2 = 64, 256
    w_fc2, b_fc2, w_proj2, b_proj2 = make_params(kp2, D2, H2)
    xt = jax.random.normal(kx4, (2, 72, D2), dtype=jnp.float32)
    yt = mlp_forward(xt, w_fc2, b_fc2, w_proj2, b_proj2, block_h=128)
    jax.block_until_ready(yt)
    assert jnp.allclose(yt, _reference(xt, w_fc2, b_fc2, w_proj2, b_proj2),
                        atol=1e-4, rtol=1e-4), "H-tiled mismatch"

    print("KERNEL_OK")
</pallas_src>

<mosaic_0001>
module attributes {stable_mosaic.version = 11 : i64} {
  func.func @_mlp_kernel(%arg0: i32, %arg1: i32, %arg2: memref<16x32xf32, #tpu.memory_space<vmem>>, %arg3: memref<32x128xf32, #tpu.memory_space<vmem>>, %arg4: memref<1x128xf32, #tpu.memory_space<vmem>>, %arg5: memref<128x32xf32, #tpu.memory_space<vmem>>, %arg6: memref<1x32xf32, #tpu.memory_space<vmem>>, %arg7: memref<16x32xf32, #tpu.memory_space<vmem>>) attributes {dimension_semantics = [#tpu.dimension_semantics<parallel>, #tpu.dimension_semantics<arbitrary>], iteration_bounds = array<i64: 1, 1>, scalar_prefetch = 0 : i64, scratch_operands = 0 : i64, tpu.core_type = #tpu.core_type<tc>, window_params = [{pipeline_mode = #tpu.pipeline_mode<synchronous>, transform_indices = @transform_0, window_bounds = array<i64: 16, 32>}, {pipeline_mode = #tpu.pipeline_mode<synchronous>, transform_indices = @transform_1, window_bounds = array<i64: 32, 128>}, {pipeline_mode = #tpu.pipeline_mode<synchronous>, transform_indices = @transform_2, window_bounds = array<i64: 1, 128>}, {pipeline_mode = #tpu.pipeline_mode<synchronous>, transform_indices = @transform_3, window_bounds = array<i64: 128, 32>}, {pipeline_mode = #tpu.pipeline_mode<synchronous>, transform_indices = @transform_4, window_bounds = array<i64: 1, 32>}, {transform_indices = @transform_5, window_bounds = array<i64: 16, 32>}]} {
    %c0 = arith.constant 0 : index
    %c0_0 = arith.constant 0 : index
    %0 = vector.load %arg2[%c0, %c0_0] : memref<16x32xf32, #tpu.memory_space<vmem>>, vector<16x32xf32>
    %c0_1 = arith.constant 0 : index
    %c0_2 = arith.constant 0 : index
    %1 = vector.load %arg3[%c0_1, %c0_2] : memref<32x128xf32, #tpu.memory_space<vmem>>, vector<32x128xf32>
    %cst = arith.constant dense<0.000000e+00> : vector<16x128xf32>
    %2 = tpu.matmul %0, %1, %cst {dimension_numbers = #tpu.dot_dimension_numbers<[1], [0], [0], [1], [0, 0, 1, 1], [], []>} : vector<16x32xf32>, vector<32x128xf32>, vector<16x128xf32> -> vector<16x128xf32>
    %c0_3 = arith.constant 0 : index
    %c0_4 = arith.constant 0 : index
    %3 = vector.load %arg4[%c0_3, %c0_4] : memref<1x128xf32, #tpu.memory_space<vmem>>, vector<1x128xf32>
    %4 = vector.broadcast %3 : vector<1x128xf32> to vector<16x128xf32>
    %5 = arith.addf %2, %4 : vector<16x128xf32>
    %cst_5 = arith.constant 5.000000e-01 : f32
    %6 = vector.broadcast %cst_5 : f32 to vector<16x128xf32>
    %7 = arith.mulf %6, %5 : vector<16x128xf32>
    %cst_6 = arith.constant 4.471500e-02 : f32
    %8 = vector.broadcast %cst_6 : f32 to vector<16x128xf32>
    %9 = arith.mulf %8, %5 : vector<16x128xf32>
    %10 = arith.mulf %9, %5 : vector<16x128xf32>
    %11 = arith.mulf %10, %5 : vector<16x128xf32>
    %12 = arith.addf %5, %11 : vector<16x128xf32>
    %cst_7 = arith.constant 0.797884583 : f32
    %13 = vector.broadcast %cst_7 : f32 to vector<16x128xf32>
    %14 = arith.mulf %13, %12 : vector<16x128xf32>
    %15 = math.tanh %14 : vector<16x128xf32>
    %cst_8 = arith.constant 1.000000e+00 : f32
    %16 = vector.broadcast %cst_8 : f32 to vector<16x128xf32>
    %17 = arith.addf %16, %15 : vector<16x128xf32>
    %18 = arith.mulf %7, %17 : vector<16x128xf32>
    %c0_9 = arith.constant 0 : index
    %c0_10 = arith.constant 0 : index
    %19 = vector.load %arg5[%c0_9, %c0_10] : memref<128x32xf32, #tpu.memory_space<vmem>>, vector<128x32xf32>
    %cst_11 = arith.constant dense<0.000000e+00> : vector<16x32xf32>
    %20 = tpu.matmul %18, %19, %cst_11 {dimension_numbers = #tpu.dot_dimension_numbers<[1], [0], [0], [1], [0, 0, 1, 1], [], []>} : vector<16x128xf32>, vector<128x32xf32>, vector<16x32xf32> -> vector<16x32xf32>
    %c0_12 = arith.constant 0 : index
    %c0_13 = arith.constant 0 : index
    %21 = vector.load %arg6[%c0_12, %c0_13] : memref<1x32xf32, #tpu.memory_space<vmem>>, vector<1x32xf32>
    %22 = vector.broadcast %21 : vector<1x32xf32> to vector<16x32xf32>
    %23 = arith.addf %20, %22 : vector<16x32xf32>
    %c0_14 = arith.constant 0 : index
    %c0_15 = arith.constant 0 : index
    %24 = vector.load %arg7[%c0_14, %c0_15] : memref<16x32xf32, #tpu.memory_space<vmem>>, vector<16x32xf32>
    tpu.vector_store %arg7[%c0_14, %c0_15], %23 {strides = array<i32>} : memref<16x32xf32, #tpu.memory_space<vmem>>, vector<16x32xf32>,
    return
  }
  func.func @transform_0(%arg0: i32, %arg1: i32) -> (i32, i32) {
    %c0_i32 = arith.constant 0 : i32
    %c0_i32_0 = arith.constant 0 : i32
    return %arg0, %c0_i32 : i32, i32
  }
  func.func @transform_1(%arg0: i32, %arg1: i32) -> (i32, i32) {
    %c0_i32 = arith.constant 0 : i32
    %c0_i32_0 = arith.constant 0 : i32
    return %c0_i32, %arg1 : i32, i32
  }
  func.func @transform_2(%arg0: i32, %arg1: i32) -> (i32, i32) {
    %c0_i32 = arith.constant 0 : i32
    %c0_i32_0 = arith.constant 0 : i32
    return %c0_i32, %arg1 : i32, i32
  }
  func.func @transform_3(%arg0: i32, %arg1: i32) -> (i32, i32) {
    %c0_i32 = arith.constant 0 : i32
    %c0_i32_0 = arith.constant 0 : i32
    return %arg1, %c0_i32 : i32, i32
  }
  func.func @transform_4(%arg0: i32, %arg1: i32) -> (i32, i32) {
    %c0_i32 = arith.constant 0 : i32
    %c0_i32_0 = arith.constant 0 : i32
    %c0_i32_1 = arith.constant 0 : i32
    return %c0_i32, %c0_i32_0 : i32, i32
  }
  func.func @transform_5(%arg0: i32, %arg1: i32) -> (i32, i32) {
    %c0_i32 = arith.constant 0 : i32
    %c0_i32_0 = arith.constant 0 : i32
    return %arg0, %c0_i32 : i32, i32
  }
}

</mosaic_0001>

<llo_original>
// kernel: tpu_custom_call.1
$region0: #{tpu_custom_call.1}
  #allocation0 [shape = 'u32[]', space=smem, size = 0x4, offset = 0x4, fixed_abs, tag = 'smem constant byte address 0x4 - core index']
  #allocation1 [shape = 'u32[144,128]{1,0:T(1,128)}', space=vmem, size = 0x12000, scoped, tag = 'internal scratch']
  %s0 = inlined_call_operand.vmem [shape: f32[16,32], index: 0, kind: input, shape index: {}]
  %s1 = inlined_call_operand.vmem [shape: f32[32,128], index: 1, kind: input, shape index: {}]
  %s2 = inlined_call_operand.vmem [shape: f32[1,128], index: 2, kind: input, shape index: {}]
  %s3 = inlined_call_operand.vmem [shape: f32[128,32], index: 3, kind: input, shape index: {}]
  %s4 = inlined_call_operand.vmem [shape: f32[1,32], index: 4, kind: input, shape index: {}]
  %s5 = inlined_call_operand.hbm [shape: f32[16,32], index: 5, kind: output, shape index: {}]
  %s6 = sld [smem:[#allocation0]]
  $region30: #{tpu_custom_call.1} parent=0
    _
  %s8 = ssub.s32 1, %s6
  %s9 = scalar_select 0, %s8, %s6
  $region1: #{tpu_custom_call.1} parent=0
    #allocation2 [shape = 'u8[8192]{0}', space=vmem, size = 0x2000, scoped, tag = 'output window, operand 0, single buffered']
    #allocation3 [shape = 's32[1]{0}', space=sflag, size = 0x4, scoped, tag = 'scoped memory for tpu_custom_call.1']
    %10 = vsyncpa [#allocation3], 0
    // Predicated region
    $region2: #{tpu_custom_call.1} parent=1 // pred_check
      _
    $region3: #{tpu_custom_call.1} parent=1 // pred_check_branch
      %12 = sbr.rel (0) target = $region5
    $region4: #{tpu_custom_call.1} parent=1 // pred_region
      _
    $region5: #{tpu_custom_call.1} parent=1 // pred_fallthru
      _
    // Predicated region
    $region6: #{tpu_custom_call.1} parent=1 // pred_check
      _
    $region7: #{tpu_custom_call.1} parent=1 // pred_check_branch
      %14 = sbr.rel (0) target = $region9
    $region8: #{tpu_custom_call.1} parent=1 // pred_region
      _
    $region9: #{tpu_custom_call.1} parent=1 // pred_fallthru
      _
    // Predicated region
    $region10: #{tpu_custom_call.1} parent=1 // pred_check
      _
    $region11: #{tpu_custom_call.1} parent=1 // pred_check_branch
      %16 = sbr.rel (0) target = $region13
    $region12: #{tpu_custom_call.1} parent=1 // pred_region
      _
    $region13: #{tpu_custom_call.1} parent=1 // pred_fallthru
      _
    // Predicated region
    $region14: #{tpu_custom_call.1} parent=1 // pred_check
      _
    $region15: #{tpu_custom_call.1} parent=1 // pred_check_branch
      %18 = sbr.rel (0) target = $region17
    $region16: #{tpu_custom_call.1} parent=1 // pred_region
      _
    $region17: #{tpu_custom_call.1} parent=1 // pred_fallthru
      _
    // Predicated region
    $region18: #{tpu_custom_call.1} parent=1 // pred_check
      _
    $region19: #{tpu_custom_call.1} parent=1 // pred_check_branch
      %20 = sbr.rel (0) target = $region21
    $region20: #{tpu_custom_call.1} parent=1 // pred_region
      _
    $region21: #{tpu_custom_call.1} parent=1 // pred_fallthru
      _
    %v21 = vld [vmem:[%s0] sm:$0xff]
    %v22 = vld [vmem:[%s0 + $0x8] sm:$0xff]
    %v23 = vld [vmem:[%s1] sm:$0xff]
    %v24 = vld [vmem:[%s1 + $0x8] sm:$0xff]
    %v25 = vld [vmem:[%s1 + $0x10] sm:$0xff]
    %v26 = vld [vmem:[%s1 + $0x18] sm:$0xff]
    %v27 = vld [vmem:[%s2] sm:$0x1]
    %v29 = vlaneseq
    %v30 = vshrl.u32 %v29, 7
    %v31 = vsub.s32 0, %v30
    %v32 = vrot.slane %v27, %v31
    %vm34 = vcmask 261120
    %v36 = vsel %vm34, %v21, 0
    %v39 = vsel %vm34, %v22, 0
    %41 = vmatprep.subr.mxu0 0.0
    %42 = vmatpush1.msra.mxu0 %v23
    %43 = vmatprep.subr.mxu0 0.0
    %44 = vmatpush1.msra.mxu0 %v24
    %45 = vmatprep.subr.mxu0 0.0
    %46 = vmatpush1.msra.mxu0 %v25
    %47 = vmatprep.subr.mxu0 0.0
    %48 = vmatpush1.msra.mxu0 %v26
    %49 = vmatprep.subr.mxu0 0.0
    %50 = vmatpush1.msra.mxu0 0.0
    %51 = vmatprep.subr.mxu0 0.0
    %52 = vmatpush1.msra.mxu0 0.0
    %53 = vmatprep.subr.mxu0 0.0
    %54 = vmatpush1.msra.mxu0 0.0
    %55 = vmatprep.subr.mxu0 0.0
    %56 = vmatpush1.msra.mxu0 0.0
    %57 = vmatprep.subr.mxu0 0.0
    %58 = vmatpush1.msra.mxu0 0.0
    %59 = vmatprep.subr.mxu0 0.0
    %60 = vmatpush1.msra.mxu0 0.0
    %61 = vmatprep.subr.mxu0 0.0
    %62 = vmatpush1.msra.mxu0 0.0
    %63 = vmatprep.subr.mxu0 0.0
    %64 = vmatpush1.msra.mxu0 0.0
    %65 = vmatprep.subr.mxu0 0.0
    %66 = vmatpush1.msra.mxu0 0.0
    %67 = vmatprep.subr.mxu0 0.0
    %68 = vmatpush1.msra.mxu0 0.0
    %69 = vmatprep.subr.mxu0 0.0
    %70 = vmatpush1.msra.mxu0 0.0
    %71 = vmatprep.subr.mxu0 0.0
    %72 = vmatpush1.msra.mxu0 0.0
    %73 = vmatprep.subr.mxu0 0.0
    %74 = vmatpush1.msra.mxu0 0.0
    %75 = vmatprep.subr.mxu0 0.0
    %76 = vmatpush1.msra.mxu0 0.0
    %77 = vmatprep.subr.mxu0 0.0
    %78 = vmatpush1.msra.mxu0 0.0
    %79 = vmatprep.subr.mxu0 0.0
    %80 = vmatpush1.msra.mxu0 0.0
    %81 = vmatprep.subr.mxu0 0.0
    %82 = vmatpush1.msra.mxu0 0.0
    %83 = vmatprep.subr.mxu0 0.0
    %84 = vmatpush1.msra.mxu0 0.0
    %85 = vmatprep.subr.mxu0 0.0
    %86 = vmatpush1.msra.mxu0 0.0
    %87 = vmatprep.subr.mxu0 0.0
    %88 = vmatpush1.msra.mxu0 0.0
    %89 = vmatprep.subr.mxu0 0.0
    %90 = vmatpush1.msra.mxu0 0.0
    %91 = vmatprep.subr.mxu0 0.0
    %92 = vmatpush1.msra.mxu0 0.0
    %93 = vmatprep.subr.mxu0 0.0
    %94 = vmatpush1.msra.mxu0 0.0
    %95 = vmatprep.subr.mxu0 0.0
    %96 = vmatpush1.msra.mxu0 0.0
    %97 = vmatprep.subr.mxu0 0.0
    %98 = vmatpush1.msra.mxu0 0.0
    %99 = vmatprep.subr.mxu0 0.0
    %100 = vmatpush1.msra.mxu0 0.0
    %101 = vmatprep.subr.mxu0 0.0
    %102 = vmatpush1.msra.mxu0 0.0
    %103 = vmatprep.subr.mxu0 0.0
    %104 = vmatpush1.msra.mxu0 0.0
    %105 = vmatprep.mubr.f32.mxu0 0.0
    %106 = vmatmul.mubr.f32.gmra.mrb[0].mxu0 %v36
    %v107 = vpop.f32.mrb[0].mxu0
    %v108 = vadd.f32 %v32, %v107
    %v109 = vpop.f32.mrb[0].mxu0
    %110 = vmatprep.mubr.f32.mxu0 0.0
    %111 = vmatmul.mubr.f32.gmra.mrb[0].mxu0 %v39
    %v112 = vpop.f32.mrb[0].mxu0
    %v113 = vadd.f32 %v32, %v112
    %v114 = vpop.f32.mrb[0].mxu0
    %115 = vdwg.mxu0
    %v116 = vmul.f32 %v108, 0.5
    %v117 = vmul.f32 %v113, 0.5
    %v118 = vmul.f32 %v108, 0.044715
    %v119 = vmul.f32 %v113, 0.044715
    %v120 = vmul.f32 %v118, %v108
    %v121 = vmul.f32 %v119, %v113
    %v122 = vmul.f32 %v120, %v108
    %v123 = vmul.f32 %v121, %v113
    %v124 = vadd.f32 %v108, %v122
    %v125 = vadd.f32 %v113, %v123
    %v126 = vmul.f32 %v124, 0.7978846
    %v127 = vmul.f32 %v125, 0.7978846
    %v128 = vtanh.pop %v126
    %v129 = vtanh.pop %v127
    %v130 = vadd.f32 %v128, 1.0
    %v131 = vadd.f32 %v129, 1.0
    %v132 = vmul.f32 %v116, %v130
    %v133 = vmul.f32 %v117, %v131
    %v134 = vld [vmem:[%s3] sm:$0xff]
    %v135 = vld [vmem:[%s3 + $0x8] sm:$0xff]
    %v136 = vld [vmem:[%s3 + $0x10] sm:$0xff]
    %v137 = vld [vmem:[%s3 + $0x18] sm:$0xff]
    %v138 = vld [vmem:[%s3 + $0x20] sm:$0xff]
    %v139 = vld [vmem:[%s3 + $0x28] sm:$0xff]
    %v140 = vld [vmem:[%s3 + $0x30] sm:$0xff]
    %v141 = vld [vmem:[%s3 + $0x38] sm:$0xff]
    %v142 = vld [vmem:[%s3 + $0x40] sm:$0xff]
    %v143 = vld [vmem:[%s3 + $0x48] sm:$0xff]
    %v144 = vld [vmem:[%s3 + $0x50] sm:$0xff]
    %v145 = vld [vmem:[%s3 + $0x58] sm:$0xff]
    %v146 = vld [vmem:[%s3 + $0x60] sm:$0xff]
    %v147 = vld [vmem:[%s3 + $0x68] sm:$0xff]
    %v148 = vld [vmem:[%s3 + $0x70] sm:$0xff]
    %v149 = vld [vmem:[%s3 + $0x78] sm:$0xff]
    %v150 = vld [vmem:[%s4] sm:$0x1]
    %v152 = vlaneseq
    %v153 = vshrl.u32 %v152, 7
    %v154 = vsub.s32 0, %v153
    %v155 = vrot.slane %v150, %v154
    %157 = vmatprep.subr.mxu0 0.0
    %158 = vmatpush1.msra.mxu0 %v134
    %159 = vmatprep.subr.mxu0 0.0
    %160 = vmatpush1.msra.mxu0 %v135
    %161 = vmatprep.subr.mxu0 0.0
    %162 = vmatpush1.msra.mxu0 %v136
    %163 = vmatprep.subr.mxu0 0.0
    %164 = vmatpush1.msra.mxu0 %v137
    %165 = vmatprep.subr.mxu0 0.0
    %166 = vmatpush1.msra.mxu0 %v138
    %167 = vmatprep.subr.mxu0 0.0
    %168 = vmatpush1.msra.mxu0 %v139
    %169 = vmatprep.subr.mxu0 0.0
    %170 = vmatpush1.msra.mxu0 %v140
    %171 = vmatprep.subr.mxu0 0.0
    %172 = vmatpush1.msra.mxu0 %v141
    %173 = vmatprep.subr.mxu0 0.0
    %174 = vmatpush1.msra.mxu0 %v142
    %175 = vmatprep.subr.mxu0 0.0
    %176 = vmatpush1.msra.mxu0 %v143
    %177 = vmatprep.subr.mxu0 0.0
    %178 = vmatpush1.msra.mxu0 %v144
    %179 = vmatprep.subr.mxu0 0.0
    %180 = vmatpush1.msra.mxu0 %v145
    %181 = vmatprep.subr.mxu0 0.0
    %182 = vmatpush1.msra.mxu0 %v146
    %183 = vmatprep.subr.mxu0 0.0
    %184 = vmatpush1.msra.mxu0 %v147
    %185 = vmatprep.subr.mxu0 0.0
    %186 = vmatpush1.msra.mxu0 %v148
    %187 = vmatprep.subr.mxu0 0.0
    %188 = vmatpush1.msra.mxu0 %v149
    %189 = vmatprep.subr.mxu0 0.0
    %190 = vmatpush1.msra.mxu0 0.0
    %191 = vmatprep.subr.mxu0 0.0
    %192 = vmatpush1.msra.mxu0 0.0
    %193 = vmatprep.subr.mxu0 0.0
    %194 = vmatpush1.msra.mxu0 0.0
    %195 = vmatprep.subr.mxu0 0.0
    %196 = vmatpush1.msra.mxu0 0.0
    %197 = vmatprep.subr.mxu0 0.0
    %198 = vmatpush1.msra.mxu0 0.0
    %199 = vmatprep.subr.mxu0 0.0
    %200 = vmatpush1.msra.mxu0 0.0
    %201 = vmatprep.subr.mxu0 0.0
    %202 = vmatpush1.msra.mxu0 0.0
    %203 = vmatprep.subr.mxu0 0.0
    %204 = vmatpush1.msra.mxu0 0.0
    %205 = vmatprep.subr.mxu0 0.0
    %206 = vmatpush1.msra.mxu0 0.0
    %207 = vmatprep.subr.mxu0 0.0
    %208 = vmatpush1.msra.mxu0 0.0
    %209 = vmatprep.subr.mxu0 0.0
    %210 = vmatpush1.msra.mxu0 0.0
    %211 = vmatprep.subr.mxu0 0.0
    %212 = vmatpush1.msra.mxu0 0.0
    %213 = vmatprep.subr.mxu0 0.0
    %214 = vmatpush1.msra.mxu0 0.0
    %215 = vmatprep.subr.mxu0 0.0
    %216 = vmatpush1.msra.mxu0 0.0
    %217 = vmatprep.subr.mxu0 0.0
    %218 = vmatpush1.msra.mxu0 0.0
    %219 = vmatprep.subr.mxu0 0.0
    %220 = vmatpush1.msra.mxu0 0.0
    %221 = vmatprep.mubr.f32.mxu0 0.0
    %222 = vmatmul.mubr.f32.gmra.mrb[0].mxu0 %v132
    %v223 = vpop.f32.mrb[0].mxu0
    %v224 = vadd.f32 %v155, %v223
    %v225 = vpop.f32.mrb[0].mxu0
    %226 = vmatprep.mubr.f32.mxu0 0.0
    %227 = vmatmul.mubr.f32.gmra.mrb[0].mxu0 %v133
    %v228 = vpop.f32.mrb[0].mxu0
    %v229 = vadd.f32 %v155, %v228
    %v230 = vpop.f32.mrb[0].mxu0
    %231 = vdwg.mxu0
    %232 = vst.msk [vmem:[#allocation2] sm:$0xff] %vm34, %v224
    %233 = vst.msk [vmem:[#allocation2 + $0x8] sm:$0xff] %vm34, %v229
    // Predicated region
    $region22: #{tpu_custom_call.1} parent=1 // pred_check
      _
    $region23: #{tpu_custom_call.1} parent=1 // pred_check_branch
      %235 = sbr.rel (0) target = $region25
    $region24: #{tpu_custom_call.1} parent=1 // pred_region
      %s237 = ssub.s32 256, 256
      %238 = vsyncadd [#allocation3], %s237
      %s239 = sshll.u32 [#allocation2], 4
      %s240 = int_to_ptr.vmem [resolvable:$true] %s239
      %245 = dma.vmem_to_hbm [thread:$0]  %s240, 256, %s5, [#allocation3], 128, 128, 8
    $region25: #{tpu_custom_call.1} parent=1 // pred_fallthru
      _
    // Predicated region
    $region26: #{tpu_custom_call.1} parent=1 // pred_check
      _
    $region27: #{tpu_custom_call.1} parent=1 // pred_check_branch
      %247 = sbr.rel (0) target = $region29
    $region28: #{tpu_custom_call.1} parent=1 // pred_region
      %248 = dma.done [#allocation3], 256
    $region29: #{tpu_custom_call.1} parent=1 // pred_fallthru
      _
    %249 = vsyncpa [#allocation3], 1

</llo_original>
